<compile_context>
chip_gen: v7x
topology: tpu7x:2x2x1
jax: 0.10.0
libtpu: 0.0.40
codegen_flags: <defaults>
</compile_context>

<pallas_src>
from functools import partial

import jax
import jax.numpy as jnp
from jax.experimental import pallas as pl
from jax.experimental.pallas import tpu as pltpu


def _round_up(x: int, m: int) -> int:
    return ((x + m - 1) // m) * m


def _patch_embed_kernel(p_ref, w_ref, b_ref, o_ref):
    # (TM, K) @ (K, N_pad) on the MXU with f32 accumulation, then f32 bias add;
    # only the final store narrows to o_ref.dtype.
    acc = jnp.dot(p_ref[...], w_ref[...], preferred_element_type=jnp.float32)
    o_ref[...] = (acc + b_ref[...]).astype(o_ref.dtype)


def patch_embed_forward(x, weight, bias, patch_size, *, tm=1024,
                        compute_dtype=jnp.bfloat16, out_dtype=None):
    """x: (B, C, H, W); weight: (E, C, p, p); bias: (E,).

    Returns (B, num_patches, E), matching the PyTorch forward.
    out_dtype: dtype of the written output (defaults to x.dtype); use bf16 in
    production to halve the largest HBM stream. Accumulation is always f32.
    """
    B, C, H, W = x.shape
    E = weight.shape[0]
    p = patch_size
    Hp, Wp = H // p, W // p
    num_patches = Hp * Wp
    if out_dtype is None:
        out_dtype = x.dtype

    # --- patch extraction, flattened in (C, kh, kw) order (Conv2d layout) ---
    # Cast to compute dtype FIRST so any materialized intermediate is bf16.
    # (B, C, Hp, p, Wp, p) -> (B, Hp, Wp, C, p, p) -> (B*Np, C*p*p)
    xc = x.astype(compute_dtype)
    patches = xc.reshape(B, C, Hp, p, Wp, p)
    patches = patches.transpose(0, 2, 4, 1, 3, 5)
    patches = patches.reshape(B * num_patches, C * p * p)

    # Conv2d weight (E, C, p, p) -> matmul weight (K, E), bf16 for the MXU.
    w_mat = weight.reshape(E, C * p * p).T.astype(compute_dtype)

    M, K = patches.shape

    # --- tile sizes: whole (padded) E as the N tile, TM multiple of 16 -------
    N_pad = _round_up(E, 128)                       # lane-dense output tile
    TM = max(16, min(_round_up(tm, 16), _round_up(M, 16)))
    M_pad = _round_up(M, TM)

    if M_pad != M:
        # Only hit for shapes where TM does not divide M (demo shapes);
        # production shapes should pick TM dividing M to avoid this copy.
        patches = jnp.pad(patches, ((0, M_pad - M), (0, 0)))
    if N_pad != E:
        w_mat = jnp.pad(w_mat, ((0, 0), (0, N_pad - E)))
        bias = jnp.pad(bias, ((0, N_pad - E),))

    b_mat = bias.astype(jnp.float32).reshape(1, N_pad)

    grid = (M_pad // TM,)   # 1-D grid over M; weight/bias stay resident.

    out = pl.pallas_call(
        _patch_embed_kernel,
        out_shape=jax.ShapeDtypeStruct((M_pad, N_pad), out_dtype),
        grid=grid,
        in_specs=[
            pl.BlockSpec((TM, K), lambda i: (i, 0)),
            pl.BlockSpec((K, N_pad), lambda i: (0, 0)),   # constant -> no re-DMA
            pl.BlockSpec((1, N_pad), lambda i: (0, 0)),   # constant -> no re-DMA
        ],
        out_specs=pl.BlockSpec((TM, N_pad), lambda i: (i, 0)),
        compiler_params=pltpu.CompilerParams(
            dimension_semantics=("parallel",),
            # Fits double-buffered TM x K bf16 patches + TM x N_pad out tiles
            # plus the resident weight; stays under v7x's 64 MiB/TC physical.
            vmem_limit_bytes=48 * 1024 * 1024,
            allow_input_fusion=[True, False, False],
        ),
    )(patches, w_mat, b_mat)

    # Strip padding (no-op slice when no padding was needed) and restore shape.
    if M_pad != M or N_pad != E:
        out = out[:M, :E]
    return out.reshape(B, num_patches, E)


def _reference(x, weight, bias, patch_size):
    E = weight.shape[0]
    ref = jax.lax.conv_general_dilated(
        x, weight,
        window_strides=(patch_size, patch_size),
        padding="VALID",
        dimension_numbers=("NCHW", "OIHW", "NCHW"),
    ) + bias.reshape(1, E, 1, 1)
    B = x.shape[0]
    return ref.reshape(B, E, -1).transpose(0, 2, 1)   # flatten(2).transpose(1,2)


if __name__ == "__main__":
    key = jax.random.PRNGKey(0)

    # --- Test 1: small shapes consistent with the module -------------------
    # img 16x16, patch 8, 4 channels, embed_dim 32 -> num_patches = 4, M = 8.
    B, C, H, W = 2, 4, 16, 16
    patch_size = 8
    embed_dim = 32

    kx, kw, kb, k2x, k2w, k2b = jax.random.split(key, 6)
    x = jax.random.normal(kx, (B, C, H, W), dtype=jnp.float32)
    weight = jax.random.normal(
        kw, (embed_dim, C, patch_size, patch_size), dtype=jnp.float32) * 0.02
    bias = jax.random.normal(kb, (embed_dim,), dtype=jnp.float32) * 0.02

    fwd = jax.jit(partial(patch_embed_forward, patch_size=patch_size))
    out = jax.block_until_ready(fwd(x, weight, bias))
    ref = _reference(x, weight, bias, patch_size)

    assert out.shape == (B, (H // patch_size) * (W // patch_size), embed_dim)
    # bf16 operands -> slightly looser tolerance than pure-f32.
    assert jnp.allclose(out, ref, atol=2e-2, rtol=2e-2), (
        float(jnp.max(jnp.abs(out - ref))))

    # --- Test 2: exercise the multi-M-tile path (M > TM) and padding --------
    # B=4, C=3, 32x32, patch 8 -> M = 64; tm=16 -> 4 grid steps; E=64 -> N_pad=128.
    B2, C2, H2, W2 = 4, 3, 32, 32
    p2, E2 = 8, 64
    x2 = jax.random.normal(k2x, (B2, C2, H2, W2), dtype=jnp.float32)
    w2 = jax.random.normal(k2w, (E2, C2, p2, p2), dtype=jnp.float32) * 0.02
    b2 = jax.random.normal(k2b, (E2,), dtype=jnp.float32) * 0.02

    fwd2 = jax.jit(partial(patch_embed_forward, patch_size=p2, tm=16,
                           out_dtype=jnp.float32))
    out2 = jax.block_until_ready(fwd2(x2, w2, b2))
    ref2 = _reference(x2, w2, b2, p2)

    assert out2.shape == (B2, (H2 // p2) * (W2 // p2), E2)
    assert jnp.allclose(out2, ref2, atol=2e-2, rtol=2e-2), (
        float(jnp.max(jnp.abs(out2 - ref2))))

    print("KERNEL_OK")
</pallas_src>

<mosaic_0001>
module attributes {stable_mosaic.version = 11 : i64} {
  func.func @_patch_embed_kernel(%arg0: i32, %arg1: memref<16x256xbf16, #tpu.memory_space<vmem>>, %arg2: memref<256x128xbf16, #tpu.memory_space<vmem>>, %arg3: memref<1x128xf32, #tpu.memory_space<vmem>>, %arg4: memref<16x128xf32, #tpu.memory_space<vmem>>) attributes {dimension_semantics = [#tpu.dimension_semantics<parallel>], iteration_bounds = array<i64: 1>, scalar_prefetch = 0 : i64, scratch_operands = 0 : i64, tpu.core_type = #tpu.core_type<tc>, window_params = [{transform_indices = @transform_0, window_bounds = array<i64: 16, 256>}, {pipeline_mode = #tpu.pipeline_mode<synchronous>, transform_indices = @transform_1, window_bounds = array<i64: 256, 128>}, {pipeline_mode = #tpu.pipeline_mode<synchronous>, transform_indices = @transform_2, window_bounds = array<i64: 1, 128>}, {transform_indices = @transform_3, window_bounds = array<i64: 16, 128>}]} {
    %c0 = arith.constant 0 : index
    %c0_0 = arith.constant 0 : index
    %0 = vector.load %arg1[%c0, %c0_0] : memref<16x256xbf16, #tpu.memory_space<vmem>>, vector<16x256xbf16>
    %c0_1 = arith.constant 0 : index
    %c0_2 = arith.constant 0 : index
    %1 = vector.load %arg2[%c0_1, %c0_2] : memref<256x128xbf16, #tpu.memory_space<vmem>>, vector<256x128xbf16>
    %cst = arith.constant dense<0.000000e+00> : vector<16x128xf32>
    %2 = tpu.matmul %0, %1, %cst {dimension_numbers = #tpu.dot_dimension_numbers<[1], [0], [0], [1], [0, 0, 1, 1], [], []>} : vector<16x256xbf16>, vector<256x128xbf16>, vector<16x128xf32> -> vector<16x128xf32>
    %c0_3 = arith.constant 0 : index
    %c0_4 = arith.constant 0 : index
    %3 = vector.load %arg3[%c0_3, %c0_4] : memref<1x128xf32, #tpu.memory_space<vmem>>, vector<1x128xf32>
    %4 = vector.broadcast %3 : vector<1x128xf32> to vector<16x128xf32>
    %5 = arith.addf %2, %4 : vector<16x128xf32>
    %c0_5 = arith.constant 0 : index
    %c0_6 = arith.constant 0 : index
    %6 = vector.load %arg4[%c0_5, %c0_6] : memref<16x128xf32, #tpu.memory_space<vmem>>, vector<16x128xf32>
    tpu.vector_store %arg4[%c0_5, %c0_6], %5 {strides = array<i32>} : memref<16x128xf32, #tpu.memory_space<vmem>>, vector<16x128xf32>,
    return
  }
  func.func @transform_0(%arg0: i32) -> (i32, i32) {
    %c0_i32 = arith.constant 0 : i32
    %c0_i32_0 = arith.constant 0 : i32
    return %arg0, %c0_i32 : i32, i32
  }
  func.func @transform_1(%arg0: i32) -> (i32, i32) {
    %c0_i32 = arith.constant 0 : i32
    %c0_i32_0 = arith.constant 0 : i32
    %c0_i32_1 = arith.constant 0 : i32
    return %c0_i32, %c0_i32_0 : i32, i32
  }
  func.func @transform_2(%arg0: i32) -> (i32, i32) {
    %c0_i32 = arith.constant 0 : i32
    %c0_i32_0 = arith.constant 0 : i32
    %c0_i32_1 = arith.constant 0 : i32
    return %c0_i32, %c0_i32_0 : i32, i32
  }
  func.func @transform_3(%arg0: i32) -> (i32, i32) {
    %c0_i32 = arith.constant 0 : i32
    %c0_i32_0 = arith.constant 0 : i32
    return %arg0, %c0_i32 : i32, i32
  }
}

</mosaic_0001>

<llo_original>
// kernel: patch_embed_forward.2
$region0: #{patch_embed_forward.2}
  #allocation0 [shape = 'u32[]', space=smem, size = 0x4, offset = 0x4, fixed_abs, tag = 'smem constant byte address 0x4 - core index']
  #allocation1 [shape = 'u32[144,128]{1,0:T(1,128)}', space=vmem, size = 0x12000, scoped, tag = 'internal scratch']
  #allocation2 [shape = 'u32[2048]{0}', space=vmem, size = 0x2000, scoped, tag = 'scoped memory for patch_embed_forward.2']
  #allocation3 [shape = 'u32[2048]{0}', space=vmem, size = 0x2000, scoped, tag = 'scoped memory for patch_embed_forward.2']
  #allocation4 [shape = 'u32[2048]{0}', space=vmem, size = 0x2000, scoped, tag = 'scoped memory for patch_embed_forward.2']
  #allocation5 [shape = 'u32[2048]{0}', space=vmem, size = 0x2000, scoped, tag = 'scoped memory for patch_embed_forward.2']
  #allocation6 [shape = 'u32[2048]{0}', space=vmem, size = 0x2000, scoped, tag = 'scoped memory for patch_embed_forward.2']
  %s0 = inlined_call_operand.vmem [shape: bf16[256,128], index: 0, kind: input, shape index: {}]
  %s1 = inlined_call_operand.vmem [shape: f32[1,128], index: 1, kind: input, shape index: {}]
  %s2 = inlined_call_operand.vmem [shape: bf16[8,256], index: 2, kind: input, shape index: {}]
  %s3 = inlined_call_operand.<no memory space> [shape: bf16[], index: 3, kind: input, shape index: {}]
  %s4 = inlined_call_operand.vmem [shape: f32[16,128], index: 4, kind: output, shape index: {}]
  %s5 = sld [smem:[#allocation0]]
  $region22: #{patch_embed_forward.2} parent=0
    _
  %s7 = ssub.s32 1, %s5
  %s8 = scalar_select 0, %s7, %s5
  %v9 = vstv %s3
  %v10 = vunpack.i.l.bf16 %v9
  %v12 = vunpack.i.h.bf16 %v9
  $region1: #{patch_embed_forward.2} parent=0
    #allocation7 [shape = 'u8[8192]{0}', space=vmem, size = 0x2000, dematerialized = true, scoped, tag = 'FusionAdapter Buffer %fusion.1 = bf16[16,256]{1,0:T(8,128)(2,1)} fusion(%param_2.1, %param_3), kind=kLoop, calls=%fused_computation.2.clone, metadata={op_name="jit(patch_embed_forward)/jit(_pad)/pad" stack_frame_id=12}']
    // Predicated region
    $region2: #{patch_embed_forward.2} parent=1 // pred_check
      _
    $region3: #{patch_embed_forward.2} parent=1 // pred_check_branch
      %15 = sbr.rel (0) target = $region5
    $region4: #{patch_embed_forward.2} parent=1 // pred_region
      _
    $region5: #{patch_embed_forward.2} parent=1 // pred_fallthru
      _
    // Predicated region
    $region6: #{patch_embed_forward.2} parent=1 // pred_check
      _
    $region7: #{patch_embed_forward.2} parent=1 // pred_check_branch
      %17 = sbr.rel (0) target = $region9
    $region8: #{patch_embed_forward.2} parent=1 // pred_region
      _
    $region9: #{patch_embed_forward.2} parent=1 // pred_fallthru
      _
    // Predicated region
    $region10: #{patch_embed_forward.2} parent=1 // pred_check
      _
    $region11: #{patch_embed_forward.2} parent=1 // pred_check_branch
      %19 = sbr.rel (0) target = $region13
    $region12: #{patch_embed_forward.2} parent=1 // pred_region
      _
    $region13: #{patch_embed_forward.2} parent=1 // pred_fallthru
      _
    %s21 = sor.u32 255, 127
    %s22 = sand.u32 %s21, 85
    %s23 = sshrl.u32 %s22, 1
    %s24 = sor.u32 %s22, %s23
    %s25 = sand.u32 51, %s24
    %s26 = sshrl.u32 %s25, 2
    %s27 = sor.u32 %s25, %s26
    %s28 = sand.u32 15, %s27
    %v29 = vld [vmem:[%s2] sm:%s28]
    %v30 = vunpack.c.l.bf16 %v29
    %v31 = vunpack.c.h.bf16 %v29
    %v32 = vpack.c.bf16 0.0, %v30
    %34 = vst [vmem:[#allocation7] sm:$0xf] %v32
    %s35 = scalar_lea.vmem %s2, 4
    %s37 = sor.u32 255, 127
    %s38 = sand.u32 %s37, 85
    %s39 = sshrl.u32 %s38, 1
    %s40 = sor.u32 %s38, %s39
    %s41 = sand.u32 51, %s40
    %s42 = sshrl.u32 %s41, 2
    %s43 = sor.u32 %s41, %s42
    %s44 = sand.u32 15, %s43
    %v45 = vld [vmem:[%s35] sm:%s44]
    %v46 = vunpack.c.l.bf16 %v45
    %v47 = vunpack.c.h.bf16 %v45
    %s48 = scalar_lea.vmem [#allocation7], 4
    %v49 = vpack.c.bf16 0.0, %v46
    %51 = vst [vmem:[%s48] sm:$0xf] %v49
    %s52 = scalar_lea.vmem [#allocation7], 8
    %v53 = vpack.c.bf16 0.0, %v10
    %55 = vst [vmem:[%s52] sm:$0xf] %v53
    %s56 = scalar_lea.vmem [#allocation7], 12
    %v57 = vpack.c.bf16 0.0, %v10
    %59 = vst [vmem:[%s56] sm:$0xf] %v57
    %v61 = vld [vmem:[#allocation7] sm:$0xff]
    %v62 = vld [vmem:[#allocation7 + $0x8] sm:$0xff]
    %v63 = vld [vmem:[%s0] sm:$0xf]
    %v64 = vld [vmem:[%s0 + $0x4] sm:$0xf]
    %v65 = vld [vmem:[%s0 + $0x8] sm:$0xf]
    %v66 = vld [vmem:[%s0 + $0xc] sm:$0xf]
    %v67 = vld [vmem:[%s0 + $0x10] sm:$0xf]
    %v68 = vld [vmem:[%s0 + $0x14] sm:$0xf]
    %v69 = vld [vmem:[%s0 + $0x18] sm:$0xf]
    %v70 = vld [vmem:[%s0 + $0x1c] sm:$0xf]
    %v71 = vld [vmem:[%s0 + $0x20] sm:$0xf]
    %v72 = vld [vmem:[%s0 + $0x24] sm:$0xf]
    %v73 = vld [vmem:[%s0 + $0x28] sm:$0xf]
    %v74 = vld [vmem:[%s0 + $0x2c] sm:$0xf]
    %v75 = vld [vmem:[%s0 + $0x30] sm:$0xf]
    %v76 = vld [vmem:[%s0 + $0x34] sm:$0xf]
    %v77 = vld [vmem:[%s0 + $0x38] sm:$0xf]
    %v78 = vld [vmem:[%s0 + $0x3c] sm:$0xf]
    %v79 = vld [vmem:[%s0 + $0x40] sm:$0xf]
    %v80 = vld [vmem:[%s0 + $0x44] sm:$0xf]
    %v81 = vld [vmem:[%s0 + $0x48] sm:$0xf]
    %v82 = vld [vmem:[%s0 + $0x4c] sm:$0xf]
    %v83 = vld [vmem:[%s0 + $0x50] sm:$0xf]
    %v84 = vld [vmem:[%s0 + $0x54] sm:$0xf]
    %v85 = vld [vmem:[%s0 + $0x58] sm:$0xf]
    %v86 = vld [vmem:[%s0 + $0x5c] sm:$0xf]
    %v87 = vld [vmem:[%s0 + $0x60] sm:$0xf]
    %v88 = vld [vmem:[%s0 + $0x64] sm:$0xf]
    %v89 = vld [vmem:[%s0 + $0x68] sm:$0xf]
    %v90 = vld [vmem:[%s0 + $0x6c] sm:$0xf]
    %v91 = vld [vmem:[%s0 + $0x70] sm:$0xf]
    %v92 = vld [vmem:[%s0 + $0x74] sm:$0xf]
    %v93 = vld [vmem:[%s0 + $0x78] sm:$0xf]
    %v94 = vld [vmem:[%s0 + $0x7c] sm:$0xf]
    %v95 = vld [vmem:[%s1] sm:$0x1]
    %v97 = vlaneseq
    %v98 = vshrl.u32 %v97, 7
    %v99 = vsub.s32 0, %v98
    %v100 = vrot.slane %v95, %v99
    %v104 = vunpack.c.l.b16 %v61
    %v105 = vunpack.c.h.b16 %v61
    %v106 = vunpack.c.l.b16 %v62
    %v107 = vunpack.c.h.b16 %v62
    %v108 = vpack.c.b16 %v106, %v104
    %v109 = vpack.c.b16 %v107, %v105
    %v144 = vunpack.c.l.b16 %v63
    %v145 = vunpack.c.l.b16 %v64
    %v146 = vunpack.c.l.b16 %v65
    %v147 = vunpack.c.l.b16 %v66
    %v148 = vunpack.c.l.b16 %v67
    %v149 = vunpack.c.l.b16 %v68
    %v150 = vunpack.c.l.b16 %v69
    %v151 = vunpack.c.l.b16 %v70
    %v152 = vunpack.c.l.b16 %v71
    %v153 = vunpack.c.l.b16 %v72
    %v154 = vunpack.c.l.b16 %v73
    %v155 = vunpack.c.l.b16 %v74
    %v156 = vunpack.c.l.b16 %v75
    %v157 = vunpack.c.l.b16 %v76
    %v158 = vunpack.c.l.b16 %v77
    %v159 = vunpack.c.l.b16 %v78
    %v160 = vunpack.c.l.b16 %v79
    %v161 = vunpack.c.l.b16 %v80
    %v162 = vunpack.c.l.b16 %v81
    %v163 = vunpack.c.l.b16 %v82
    %v164 = vunpack.c.l.b16 %v83
    %v165 = vunpack.c.l.b16 %v84
    %v166 = vunpack.c.l.b16 %v85
    %v167 = vunpack.c.l.b16 %v86
    %v168 = vunpack.c.l.b16 %v87
    %v169 = vunpack.c.l.b16 %v88
    %v170 = vunpack.c.l.b16 %v89
    %v171 = vunpack.c.l.b16 %v90
    %v172 = vunpack.c.l.b16 %v91
    %v173 = vunpack.c.l.b16 %v92
    %v174 = vunpack.c.l.b16 %v93
    %v175 = vunpack.c.l.b16 %v94
    %v176 = vpack.c.b16 %v145, %v144
    %v177 = vpack.c.b16 %v147, %v146
    %v178 = vpack.c.b16 %v149, %v148
    %v179 = vpack.c.b16 %v151, %v150
    %v180 = vpack.c.b16 %v153, %v152
    %v181 = vpack.c.b16 %v155, %v154
    %v182 = vpack.c.b16 %v157, %v156
    %v183 = vpack.c.b16 %v159, %v158
    %v184 = vpack.c.b16 %v161, %v160
    %v185 = vpack.c.b16 %v163, %v162
    %v186 = vpack.c.b16 %v165, %v164
    %v187 = vpack.c.b16 %v167, %v166
    %v188 = vpack.c.b16 %v169, %v168
    %v189 = vpack.c.b16 %v171, %v170
    %v190 = vpack.c.b16 %v173, %v172
    %v191 = vpack.c.b16 %v175, %v174
    %208 = vmatprep.subr.bf16.mxu0 0
    %209 = vmatpush1.bf16.msra.mxu0 %v176
    %210 = vmatprep.subr.bf16.mxu0 0
    %211 = vmatpush1.bf16.msra.mxu0 %v177
    %212 = vmatprep.subr.bf16.mxu0 0
    %213 = vmatpush1.bf16.msra.mxu0 %v178
    %214 = vmatprep.subr.bf16.mxu0 0
    %215 = vmatpush1.bf16.msra.mxu0 %v179
    %216 = vmatprep.subr.bf16.mxu0 0
    %217 = vmatpush1.bf16.msra.mxu0 %v180
    %218 = vmatprep.subr.bf16.mxu0 0
    %219 = vmatpush1.bf16.msra.mxu0 %v181
    %220 = vmatprep.subr.bf16.mxu0 0
    %221 = vmatpush1.bf16.msra.mxu0 %v182
    %222 = vmatprep.subr.bf16.mxu0 0
    %223 = vmatpush1.bf16.msra.mxu0 %v183
    %224 = vmatprep.subr.bf16.mxu0 0
    %225 = vmatpush1.bf16.msra.mxu0 %v184
    %226 = vmatprep.subr.bf16.mxu0 0
    %227 = vmatpush1.bf16.msra.mxu0 %v185
    %228 = vmatprep.subr.bf16.mxu0 0
    %229 = vmatpush1.bf16.msra.mxu0 %v186
    %230 = vmatprep.subr.bf16.mxu0 0
    %231 = vmatpush1.bf16.msra.mxu0 %v187
    %232 = vmatprep.subr.bf16.mxu0 0
    %233 = vmatpush1.bf16.msra.mxu0 %v188
    %234 = vmatprep.subr.bf16.mxu0 0
    %235 = vmatpush1.bf16.msra.mxu0 %v189
    %236 = vmatprep.subr.bf16.mxu0 0
    %237 = vmatpush1.bf16.msra.mxu0 %v190
    %238 = vmatprep.subr.bf16.mxu0 0
    %239 = vmatpush1.bf16.msra.mxu0 %v191
    %240 = vmatprep.mubr.bf16.mxu0 %v109
    %241 = vmatmul.mubr.bf16.gmra.mrb[0].mxu0 %v108
    %v242 = vpop.f32.mrb[0].mxu0
    %v243 = vadd.f32 %v100, %v242
    %v244 = vpop.f32.mrb[0].mxu0
    %v245 = vpop.f32.mrb[0].mxu0
    %v246 = vadd.f32 %v100, %v245
    %v247 = vpop.f32.mrb[0].mxu0
    %248 = vdwg.mxu0
    %249 = vst [vmem:[%s4] sm:$0xff] %v243
    %250 = vst [vmem:[%s4 + $0x8] sm:$0xff] %v246
    // Predicated region
    $region14: #{patch_embed_forward.2} parent=1 // pred_check
      _
    $region15: #{patch_embed_forward.2} parent=1 // pred_check_branch
      %252 = sbr.rel (0) target = $region17
    $region16: #{patch_embed_forward.2} parent=1 // pred_region
      _
    $region17: #{patch_embed_forward.2} parent=1 // pred_fallthru
      _
    // Predicated region
    $region18: #{patch_embed_forward.2} parent=1 // pred_check
      _
    $region19: #{patch_embed_forward.2} parent=1 // pred_check_branch
      %254 = sbr.rel (0) target = $region21
    $region20: #{patch_embed_forward.2} parent=1 // pred_region
      _
    $region21: #{patch_embed_forward.2} parent=1 // pred_fallthru
      _

</llo_original>
